<compile_context>
chip_gen: v7x
topology: tpu7x:2x2x1
jax: 0.10.0
libtpu: 0.0.40
codegen_flags: <defaults>
</compile_context>

<pallas_src>
import math

import numpy as np
import jax
import jax.numpy as jnp
from jax.experimental import pallas as pl
from jax.experimental.pallas import tpu as pltpu

K_NEIGHBORS = 5
DIMS = 5
NUM_CLASSES = 6
# Explicit scoped-VMEM ceiling: >= v6e/v7x default, raises v5e's 16 MiB default.
_VMEM_LIMIT = 32 * 1024 * 1024


def _pad_to(n, m):
    return ((n + m - 1) // m) * m


# --------------------------------------------------------------------------- #
# Pallas kernel 1: Dense (Linear + ReLU).  Used standalone only where plain-   #
# JAX glue sits upstream (raw input features; pool+concat before pcnn5).       #
# Everywhere else this Dense is fused as an epilogue of the previous xconv.    #
# --------------------------------------------------------------------------- #
def _dense_relu_kernel(x_ref, w_ref, b_ref, o_ref):
    y = jnp.dot(x_ref[...], w_ref[...], preferred_element_type=jnp.float32)
    o_ref[...] = jnp.maximum(y + b_ref[...], 0.0).astype(o_ref.dtype)


def dense_relu(x, w, b, *, tile_target=1024):
    """x: (M, Cin), w: (Cin, Cf_pad) bf16, b: (1, Cf_pad) f32 -> (M, Cf_pad) bf16."""
    x = x.astype(jnp.bfloat16)
    M, Cin = x.shape
    Cout_pad = w.shape[1]
    tile_m = min(tile_target, _pad_to(M, 8))
    Mp = _pad_to(M, tile_m)
    if Mp != M:
        x = jnp.pad(x, ((0, Mp - M), (0, 0)))
    out = pl.pallas_call(
        _dense_relu_kernel,
        out_shape=jax.ShapeDtypeStruct((Mp, Cout_pad), jnp.bfloat16),
        grid=(Mp // tile_m,),
        in_specs=[
            pl.BlockSpec((tile_m, Cin), lambda i: (i, 0)),
            pl.BlockSpec((Cin, Cout_pad), lambda i: (0, 0)),
            pl.BlockSpec((1, Cout_pad), lambda i: (0, 0)),
        ],
        out_specs=pl.BlockSpec((tile_m, Cout_pad), lambda i: (i, 0)),
        compiler_params=pltpu.CompilerParams(
            dimension_semantics=("parallel",), vmem_limit_bytes=_VMEM_LIMIT),
    )(x, w, b)
    return out[:M]


# --------------------------------------------------------------------------- #
# Pallas kernel 2: fused XConv core.                                           #
#   block-diag lift MLP, gathered-feature placement into cats (bf16 scratch),  #
#   X-transform (tiny K*K), X-apply via lane-broadcast FMAs, end conv          #
#   accumulated per neighbor slot, optional fused next-layer Dense epilogue.   #
# --------------------------------------------------------------------------- #
def _make_xconv_kernel(K, Cf, Ccp, emit_next):
    f32, bf16 = jnp.float32, jnp.bfloat16

    def kernel(*refs):
        if emit_next:
            (grp_ref, fr_ref,
             w1_ref, b1_ref, w2_ref, bcat_ref,
             wx0_ref, bx0_ref, wx1_ref, bx1_ref, wx2_ref, bx2_ref,
             wf_ref, bf_ref, wpn_ref, bpn_ref,
             out_ref, cats_ref, acc_ref) = refs
        else:
            (grp_ref, fr_ref,
             w1_ref, b1_ref, w2_ref, bcat_ref,
             wx0_ref, bx0_ref, wx1_ref, bx1_ref, wx2_ref, bx2_ref,
             wf_ref, bf_ref,
             out_ref, cats_ref, acc_ref) = refs
            wpn_ref = bpn_ref = None

        g = grp_ref[...]                                           # (TP, K*dims) bf16

        # ---- per-neighbor lift MLP (block-diagonal over the K neighbors) ----
        l1 = jnp.maximum(
            jnp.dot(g, w1_ref[...], preferred_element_type=f32) + b1_ref[...], 0.0)
        pre = (jnp.dot(l1.astype(bf16), w2_ref[...], preferred_element_type=f32)
               + bcat_ref[...])
        # cats layout per neighbor block j (Ccp=128 wide, feat-first):
        #   [0:Cf)        gathered (already activated) neighbor features
        #   [Cf:Cf+Cmid)  lifted local-coordinate features (placed via W2p)
        #   [Cf+Cmid:Ccp) zero padding
        cats_ref[...] = jnp.maximum(pre, 0.0).astype(bf16)
        for j in range(K):
            cats_ref[:, j * Ccp: j * Ccp + Cf] = fr_ref[:, j * Cf:(j + 1) * Cf]

        # ---- X-transformation MLP on the flattened local coords -> (TP, K*K) ----
        x0 = jnp.maximum(
            jnp.dot(g, wx0_ref[...], preferred_element_type=f32) + bx0_ref[...], 0.0)
        x1 = jnp.maximum(
            jnp.dot(x0.astype(bf16), wx1_ref[...], preferred_element_type=f32)
            + bx1_ref[...], 0.0)
        x2 = (jnp.dot(x1.astype(bf16), wx2_ref[...], preferred_element_type=f32)
              + bx2_ref[...])                                       # (TP, K*K) f32

        # ---- fts_X = X @ cats fused with the end conv, one neighbor slot i at
        #      a time, accumulated into the f32 VMEM accumulator ----
        for i in range(K):
            mix = x2[:, i * K: i * K + 1] * cats_ref[:, 0:Ccp]
            for j in range(1, K):
                mix = mix + (x2[:, i * K + j: i * K + j + 1]
                             * cats_ref[:, j * Ccp:(j + 1) * Ccp])
            part = jnp.dot(mix.astype(bf16), wf_ref[i * Ccp:(i + 1) * Ccp, :],
                           preferred_element_type=f32)
            if i == 0:
                acc_ref[...] = part
            else:
                acc_ref[...] += part

        out = jnp.maximum(acc_ref[...] + bf_ref[...], 0.0)          # BN = identity (eval)
        if emit_next:
            # next layer's pre-XConv Dense fused as an epilogue; the raw layer
            # output is not stored because nothing downstream reads it.
            out_ref[...] = jnp.maximum(
                jnp.dot(out.astype(bf16), wpn_ref[...], preferred_element_type=f32)
                + bpn_ref[...], 0.0).astype(out_ref.dtype)
        else:
            out_ref[...] = out.astype(out_ref.dtype)

    return kernel


def xconv_core(grp, fr, wts, next_wts, *, K, Cf, Ccp, Cout_pad, Cfn_pad,
               tile_target=512):
    PT, KD = grp.shape
    tile_p = min(tile_target, _pad_to(PT, 8))
    PTp = _pad_to(PT, tile_p)
    if PTp != PT:
        grp = jnp.pad(grp, ((0, PTp - PT), (0, 0)))
        fr = jnp.pad(fr, ((0, PTp - PT), (0, 0)))

    emit_next = next_wts is not None
    weights = list(wts) + (list(next_wts) if emit_next else [])
    kernel = _make_xconv_kernel(K, Cf, Ccp, emit_next)

    def _w_spec(w):
        nd = w.ndim
        return pl.BlockSpec(w.shape, lambda t, _nd=nd: (0,) * _nd)

    in_specs = ([pl.BlockSpec((tile_p, KD), lambda t: (t, 0)),
                 pl.BlockSpec((tile_p, K * Cf), lambda t: (t, 0))]
                + [_w_spec(w) for w in weights])

    out_w = Cfn_pad if emit_next else Cout_pad
    out = pl.pallas_call(
        kernel,
        out_shape=jax.ShapeDtypeStruct((PTp, out_w), jnp.bfloat16),
        grid=(PTp // tile_p,),
        in_specs=in_specs,
        out_specs=pl.BlockSpec((tile_p, out_w), lambda t: (t, 0)),
        scratch_shapes=[pltpu.VMEM((tile_p, K * Ccp), jnp.bfloat16),   # cats
                        pltpu.VMEM((tile_p, Cout_pad), jnp.float32)],  # end-conv acc
        compiler_params=pltpu.CompilerParams(
            dimension_semantics=("parallel",), vmem_limit_bytes=_VMEM_LIMIT),
    )(grp, fr, *weights)
    return out[:PT]


# --------------------------------------------------------------------------- #
# JAX glue: KNN (knn_indices_func_gpu semantics), gather, layer plumbing.      #
# --------------------------------------------------------------------------- #
def knn_indices(rep, pts, k, d):
    # k*d+1 nearest (incl. self), drop self, take every d-th -> (N, P, k)
    # TODO(synk): torch.topk tie-order may differ from lax.top_k on exact ties.
    d2 = jnp.sum((rep[:, :, None, :] - pts[:, None, :, :]) ** 2, axis=-1)
    _, idx = jax.lax.top_k(-d2, k * d + 1)
    return idx[:, :, 1::d][:, :, :k]


def gather_neighbors(x, idx):
    return jax.vmap(lambda xb, ib: xb[ib])(x, idx)  # (N, P, K, C)


def xconv_layer(lp, lp_next, rep, pts, f2):
    """One PointCNN layer's XConv.  `f2` = this layer's pre-XConv Dense output
    (point-major, Cf wide, bf16).  Returns the next layer's Dense features when
    `lp_next` is given (fused epilogue), else the padded bf16 layer output."""
    K, D = lp["K"], lp["D"]
    Cf, Ccp, Cout_pad = lp["Cf"], lp["Ccp"], lp["Cout_pad"]
    N, Pq, _ = rep.shape

    idx = knn_indices(rep, pts, K, D)                       # (N, Pq, K)
    pts_reg = gather_neighbors(pts, idx)                    # (N, Pq, K, dims)
    fts_reg = gather_neighbors(f2, idx)                     # (N, Pq, K, Cf) bf16
    pts_local = (pts_reg - rep[:, :, None, :]).astype(jnp.bfloat16)

    PT = N * Pq
    grp = pts_local.reshape(PT, K * lp["dims"])
    fr = fts_reg.reshape(PT, K * Cf)                        # dense, no zero padding

    wts = [lp[n] for n in ("W1b", "b1b", "W2p", "bcat", "Wx0", "bx0",
                           "Wx1", "bx1", "Wx2", "bx2", "Wfused", "bfused")]
    if lp_next is None:
        out = xconv_core(grp, fr, wts, None, K=K, Cf=Cf, Ccp=Ccp,
                         Cout_pad=Cout_pad, Cfn_pad=None)
        return out.reshape(N, Pq, Cout_pad)                 # padded bf16, lane-dense
    nxt = (lp_next["Wpre"], lp_next["bpre"])
    f2n = xconv_core(grp, fr, wts, nxt, K=K, Cf=Cf, Ccp=Ccp,
                     Cout_pad=Cout_pad, Cfn_pad=lp_next["Cf_pad"])
    return f2n[:, :lp_next["Cf"]].reshape(N, Pq, lp_next["Cf"])


def classifier_forward(params, x):
    pts0, rep_pts, rep_fts = x
    bf16 = jnp.bfloat16
    p = params

    # pcnn1's pre-XConv Dense on the raw 5-dim input features (standalone).
    p1 = p["pcnn1"]
    Ns, Ms, Cin0 = rep_fts.shape
    f2 = dense_relu(rep_fts.reshape(Ns * Ms, Cin0), p1["Wpre"], p1["bpre"])
    f2 = f2[:, :p1["Cf"]].reshape(Ns, Ms, p1["Cf"])

    # pcnn1..pcnn4 (each fused xconv emits the next layer's Dense features).
    f2 = xconv_layer(p["pcnn1"], p["pcnn2"], pts0, rep_pts, f2)
    f2 = xconv_layer(p["pcnn2"], p["pcnn3"], rep_pts, rep_pts, f2)
    f2 = xconv_layer(p["pcnn3"], p["pcnn4"], rep_pts, rep_pts, f2)
    out4 = xconv_layer(p["pcnn4"], None, rep_pts, rep_pts, f2)   # (N, P, 128) bf16

    # global max-pool + tile + concat with coordinates (plain-JAX glue).
    N, n_pts, _ = out4.shape
    pc_feat = jnp.max(out4, axis=1, keepdims=True)
    pc_feat = jnp.tile(pc_feat, (1, n_pts, 1))
    feat5 = jnp.concatenate([rep_pts.astype(bf16), pc_feat], axis=2)   # (N, P, 133)

    p5 = p["pcnn5"]
    f2 = dense_relu(feat5.reshape(N * n_pts, feat5.shape[-1]), p5["Wpre"], p5["bpre"])
    f2 = f2[:, :p5["Cf"]].reshape(N, n_pts, p5["Cf"])

    f2 = xconv_layer(p["pcnn5"], p["pcnn6"], rep_pts, rep_pts, f2)
    f2 = xconv_layer(p["pcnn6"], p["pcnn7"], rep_pts, rep_pts, f2)
    f2 = xconv_layer(p["pcnn7"], p["pcnn8"], rep_pts, rep_pts, f2)
    f2 = xconv_layer(p["pcnn8"], p["pcnn9"], rep_pts, rep_pts, f2)
    out9 = xconv_layer(p["pcnn9"], None, rep_pts, rep_pts, f2)   # (N, P, 128) bf16

    # self.fcn (Dense(32, num_classes)) exists in __init__ but is never applied.
    return out9[..., :NUM_CLASSES].astype(jnp.float32)


# --------------------------------------------------------------------------- #
# Deterministic synthetic parameters (shapes follow PointCNN/XConv __init__),  #
# pre-fused / pre-padded into the forms the kernels consume.                   #
# --------------------------------------------------------------------------- #
def init_pointcnn_params(key, C_in, C_out, K, D, dims, C_carry):
    """C_carry = width of the (lane-dense, padded) tensor this layer's Dense
    consumes: previous layer's Cout_pad for fused layers, raw width otherwise."""
    Cf = C_out // 2                      # Dense(C_in, C_out // 2)
    Cmid = C_out // 4                    # C_mid when C_in != 0
    dm = min(int(math.ceil(C_out / C_in)), 4)
    Cc = Cmid + Cf
    Ccp = _pad_to(Cc, 128)
    Cout_pad = _pad_to(C_out, 128)
    Cf_pad = _pad_to(Cf, 128)
    Cdm = Cc * dm
    KK = K * K
    ks = jax.random.split(key, 8)

    def rnd(k, shape, fan_in):
        return np.asarray(jax.random.normal(k, shape, jnp.float32)) / np.sqrt(float(fan_in))

    # raw weights (mirroring the torch module's layer shapes; biases zero)
    Wpre = rnd(ks[0], (C_in, Cf), C_in)
    W1 = rnd(ks[1], (dims, Cmid), dims)
    W2 = rnd(ks[2], (Cmid, Cmid), Cmid)
    Wx0 = rnd(ks[3], (K * dims, KK), K * dims)
    Wx1 = rnd(ks[4], (KK, KK), KK)
    Wx2 = rnd(ks[5], (KK, KK), KK)
    Wdep = rnd(ks[6], (Cc, dm, K), K)            # depthwise (groups=Cc) conv weights
    Wp = rnd(ks[7], (Cdm, C_out), Cdm)           # pointwise conv weights
    bd = np.zeros((Cdm,), np.float32)            # depthwise bias

    # ---- fused / padded forms ----
    # pre-XConv Dense with rows padded to the carried lane-dense width
    Wpre_p = np.zeros((C_carry, Cf_pad), np.float32)
    Wpre_p[:C_in, :Cf] = Wpre
    # per-neighbor dense1 as one block-diagonal matmul
    W1b = np.kron(np.eye(K, dtype=np.float32), W1)         # (K*dims, K*Cmid)
    # dense2 placed directly into the cats layout (feat-first per 128-block)
    W2p = np.zeros((K * Cmid, K * Ccp), np.float32)
    for j in range(K):
        W2p[j * Cmid:(j + 1) * Cmid, j * Ccp + Cf: j * Ccp + Cf + Cmid] = W2
    # fold depthwise + pointwise: Wt[i, c, o] = sum_d Wdep[c,d,i] * Wp[c*dm+d, o]
    Wp3 = Wp.reshape(Cc, dm, C_out)
    Wt = np.einsum("cdi,cdo->ico", Wdep, Wp3)              # (K, Cc, C_out), lift-first
    perm = list(range(Cmid, Cc)) + list(range(Cmid))       # reorder to feat-first
    Wt = Wt[:, perm, :]
    Wfused = np.zeros((K * Ccp, Cout_pad), np.float32)
    for i in range(K):
        Wfused[i * Ccp: i * Ccp + Cc, :C_out] = Wt[i]
    bfused = np.zeros((1, Cout_pad), np.float32)
    bfused[0, :C_out] = bd @ Wp

    bf16 = jnp.bfloat16
    return dict(
        K=K, D=D, dims=dims, Cf=Cf, Cf_pad=Cf_pad, Cmid=Cmid, Cc=Cc, Ccp=Ccp,
        Cout=C_out, Cout_pad=Cout_pad,
        Wpre=jnp.asarray(Wpre_p, bf16), bpre=jnp.zeros((1, Cf_pad), jnp.float32),
        W1b=jnp.asarray(W1b, bf16), b1b=jnp.zeros((1, K * Cmid), jnp.float32),
        W2p=jnp.asarray(W2p, bf16), bcat=jnp.zeros((1, K * Ccp), jnp.float32),
        Wx0=jnp.asarray(Wx0, bf16), bx0=jnp.zeros((1, KK), jnp.float32),
        Wx1=jnp.asarray(Wx1, bf16), bx1=jnp.zeros((1, KK), jnp.float32),
        Wx2=jnp.asarray(Wx2, bf16), bx2=jnp.zeros((1, KK), jnp.float32),
        Wfused=jnp.asarray(Wfused, bf16), bfused=jnp.asarray(bfused, jnp.float32),
    )


def init_classifier_params(key):
    # (name, C_in, C_out, D, carried-input width fed to this layer's Dense)
    cfgs = [("pcnn1", 5, 32, 1, 5),
            ("pcnn2", 32, 64, 2, 128),     # = pcnn1 Cout_pad
            ("pcnn3", 64, 96, 2, 128),
            ("pcnn4", 96, 128, 2, 128),
            ("pcnn5", 133, 160, 2, 133),   # concat(rep_pts, pooled 128)
            ("pcnn6", 160, 128, 2, 256),   # = pcnn5 Cout_pad
            ("pcnn7", 128, 96, 2, 128),
            ("pcnn8", 96, 64, 2, 128),
            ("pcnn9", 64, 6, 1, 128)]
    keys = jax.random.split(key, len(cfgs))
    return {name: init_pointcnn_params(k, cin, cout, K=K_NEIGHBORS, D=d,
                                       dims=DIMS, C_carry=carry)
            for k, (name, cin, cout, d, carry) in zip(keys, cfgs)}


# --------------------------------------------------------------------------- #
if __name__ == "__main__":
    key = jax.random.PRNGKey(0)
    kp, kx, kf = jax.random.split(key, 3)

    N, P = 2, 16                                   # batch=2, 16 points / cloud
    params = init_classifier_params(kp)
    pts = jax.random.normal(kx, (N, P, DIMS), jnp.float32)   # 5-D "coordinates"
    fts = jax.random.normal(kf, (N, P, 5), jnp.float32)      # 5 input features
    x = (pts, pts, fts)                            # (_, rep_pts, rep_fts)

    logits = classifier_forward(params, x)
    logits = jax.block_until_ready(logits)
    assert logits.shape == (N, P, NUM_CLASSES)
    assert bool(jnp.all(jnp.isfinite(logits)))
    print("KERNEL_OK")
</pallas_src>

<mosaic_0001>
module attributes {stable_mosaic.version = 11 : i64} {
  func.func @_dense_relu_kernel(%arg0: i32, %arg1: memref<32x5xbf16, #tpu.memory_space<vmem>>, %arg2: memref<5x128xbf16, #tpu.memory_space<vmem>>, %arg3: memref<1x128xf32, #tpu.memory_space<vmem>>, %arg4: memref<32x128xbf16, #tpu.memory_space<vmem>>) attributes {dimension_semantics = [#tpu.dimension_semantics<parallel>], iteration_bounds = array<i64: 1>, scalar_prefetch = 0 : i64, scratch_operands = 0 : i64, tpu.core_type = #tpu.core_type<tc>, window_params = [{transform_indices = @transform_0, window_bounds = array<i64: 32, 5>}, {pipeline_mode = #tpu.pipeline_mode<synchronous>, transform_indices = @transform_1, window_bounds = array<i64: 5, 128>}, {pipeline_mode = #tpu.pipeline_mode<synchronous>, transform_indices = @transform_2, window_bounds = array<i64: 1, 128>}, {transform_indices = @transform_3, window_bounds = array<i64: 32, 128>}]} {
    %c0 = arith.constant 0 : index
    %c0_0 = arith.constant 0 : index
    %0 = vector.load %arg1[%c0, %c0_0] : memref<32x5xbf16, #tpu.memory_space<vmem>>, vector<32x5xbf16>
    %c0_1 = arith.constant 0 : index
    %c0_2 = arith.constant 0 : index
    %1 = vector.load %arg2[%c0_1, %c0_2] : memref<5x128xbf16, #tpu.memory_space<vmem>>, vector<5x128xbf16>
    %cst = arith.constant dense<0.000000e+00> : vector<32x128xf32>
    %2 = tpu.matmul %0, %1, %cst {dimension_numbers = #tpu.dot_dimension_numbers<[1], [0], [0], [1], [0, 0, 1, 1], [], []>} : vector<32x5xbf16>, vector<5x128xbf16>, vector<32x128xf32> -> vector<32x128xf32>
    %c0_3 = arith.constant 0 : index
    %c0_4 = arith.constant 0 : index
    %3 = vector.load %arg3[%c0_3, %c0_4] : memref<1x128xf32, #tpu.memory_space<vmem>>, vector<1x128xf32>
    %4 = vector.broadcast %3 : vector<1x128xf32> to vector<32x128xf32>
    %5 = arith.addf %2, %4 : vector<32x128xf32>
    %cst_5 = arith.constant 0.000000e+00 : f32
    %6 = vector.broadcast %cst_5 : f32 to vector<32x128xf32>
    %7 = arith.maximumf %5, %6 : vector<32x128xf32>
    %8 = arith.truncf %7 : vector<32x128xf32> to vector<32x128xbf16>
    %c0_6 = arith.constant 0 : index
    %c0_7 = arith.constant 0 : index
    %9 = vector.load %arg4[%c0_6, %c0_7] : memref<32x128xbf16, #tpu.memory_space<vmem>>, vector<32x128xbf16>
    tpu.vector_store %arg4[%c0_6, %c0_7], %8 {strides = array<i32>} : memref<32x128xbf16, #tpu.memory_space<vmem>>, vector<32x128xbf16>,
    return
  }
  func.func @transform_0(%arg0: i32) -> (i32, i32) {
    %c0_i32 = arith.constant 0 : i32
    %c0_i32_0 = arith.constant 0 : i32
    return %arg0, %c0_i32 : i32, i32
  }
  func.func @transform_1(%arg0: i32) -> (i32, i32) {
    %c0_i32 = arith.constant 0 : i32
    %c0_i32_0 = arith.constant 0 : i32
    %c0_i32_1 = arith.constant 0 : i32
    return %c0_i32, %c0_i32_0 : i32, i32
  }
  func.func @transform_2(%arg0: i32) -> (i32, i32) {
    %c0_i32 = arith.constant 0 : i32
    %c0_i32_0 = arith.constant 0 : i32
    %c0_i32_1 = arith.constant 0 : i32
    return %c0_i32, %c0_i32_0 : i32, i32
  }
  func.func @transform_3(%arg0: i32) -> (i32, i32) {
    %c0_i32 = arith.constant 0 : i32
    %c0_i32_0 = arith.constant 0 : i32
    return %arg0, %c0_i32 : i32, i32
  }
}

</mosaic_0001>

<llo_original>
// kernel: tpu_custom_call.1
$region0: #{tpu_custom_call.1}
  #allocation0 [shape = 'u32[]', space=smem, size = 0x4, offset = 0x4, fixed_abs, tag = 'smem constant byte address 0x4 - core index']
  #allocation1 [shape = 'u32[144,128]{1,0:T(1,128)}', space=vmem, size = 0x12000, scoped, tag = 'internal scratch']
  %s0 = inlined_call_operand.vmem [shape: bf16[32,5], index: 0, kind: input, shape index: {}]
  %s1 = inlined_call_operand.vmem [shape: bf16[5,128], index: 1, kind: input, shape index: {}]
  %s2 = inlined_call_operand.vmem [shape: f32[1,128], index: 2, kind: input, shape index: {}]
  %s3 = inlined_call_operand.hbm [shape: bf16[32,128], index: 3, kind: output, shape index: {}]
  %s4 = sld [smem:[#allocation0]]
  $region22: #{tpu_custom_call.1} parent=0
    _
  %s6 = ssub.s32 1, %s4
  %s7 = scalar_select 0, %s6, %s4
  $region1: #{tpu_custom_call.1} parent=0
    #allocation2 [shape = 'u8[8192]{0}', space=vmem, size = 0x2000, scoped, tag = 'output window, operand 0, single buffered']
    #allocation3 [shape = 's32[1]{0}', space=sflag, size = 0x4, scoped, tag = 'scoped memory for tpu_custom_call.1']
    %8 = vsyncpa [#allocation3], 0
    // Predicated region
    $region2: #{tpu_custom_call.1} parent=1 // pred_check
      _
    $region3: #{tpu_custom_call.1} parent=1 // pred_check_branch
      %10 = sbr.rel (0) target = $region5
    $region4: #{tpu_custom_call.1} parent=1 // pred_region
      _
    $region5: #{tpu_custom_call.1} parent=1 // pred_fallthru
      _
    // Predicated region
    $region6: #{tpu_custom_call.1} parent=1 // pred_check
      _
    $region7: #{tpu_custom_call.1} parent=1 // pred_check_branch
      %12 = sbr.rel (0) target = $region9
    $region8: #{tpu_custom_call.1} parent=1 // pred_region
      _
    $region9: #{tpu_custom_call.1} parent=1 // pred_fallthru
      _
    // Predicated region
    $region10: #{tpu_custom_call.1} parent=1 // pred_check
      _
    $region11: #{tpu_custom_call.1} parent=1 // pred_check_branch
      %14 = sbr.rel (0) target = $region13
    $region12: #{tpu_custom_call.1} parent=1 // pred_region
      _
    $region13: #{tpu_custom_call.1} parent=1 // pred_fallthru
      _
    %v16 = vld [vmem:[%s0] sm:$0xf]
    %v17 = vld [vmem:[%s0 + $0x4] sm:$0xf]
    %v18 = vld [vmem:[%s0 + $0x8] sm:$0xf]
    %v19 = vld [vmem:[%s0 + $0xc] sm:$0xf]
    %v20 = vld [vmem:[%s1] sm:$0x7]
    %v21 = vld [vmem:[%s2] sm:$0x1]
    %v23 = vlaneseq
    %v24 = vshrl.u32 %v23, 7
    %v25 = vsub.s32 0, %v24
    %v26 = vrot.slane %v21, %v25
    %v32 = vunpack.c.l.b16 %v16
    %v33 = vunpack.c.l.b16 %v17
    %v34 = vunpack.c.l.b16 %v18
    %v35 = vunpack.c.l.b16 %v19
    %v36 = vpack.c.b16 %v33, %v32
    %v37 = vpack.c.b16 %v35, %v34
    %vm38 = vcmask 39936
    %v40 = vsel %vm38, %v36, 0
    %v43 = vsel %vm38, %v37, 0
    %vm45 = vcmask 1041408
    %vm46 = vcmask 1042432
    %v47 = vsel %vm45, 4294967295, 65535
    %v48 = vsel %vm46, %v47, 0
    %v50 = vand.u32 %v20, %v48
    %52 = vmatprep.subr.bf16.mxu0 0
    %53 = vmatpush1.bf16.msra.mxu0 %v50
    %54 = vmatprep.subr.bf16.mxu0 0
    %55 = vmatpush1.bf16.msra.mxu0 0
    %56 = vmatprep.subr.bf16.mxu0 0
    %57 = vmatpush1.bf16.msra.mxu0 0
    %58 = vmatprep.subr.bf16.mxu0 0
    %59 = vmatpush1.bf16.msra.mxu0 0
    %60 = vmatprep.subr.bf16.mxu0 0
    %61 = vmatpush1.bf16.msra.mxu0 0
    %62 = vmatprep.subr.bf16.mxu0 0
    %63 = vmatpush1.bf16.msra.mxu0 0
    %64 = vmatprep.subr.bf16.mxu0 0
    %65 = vmatpush1.bf16.msra.mxu0 0
    %66 = vmatprep.subr.bf16.mxu0 0
    %67 = vmatpush1.bf16.msra.mxu0 0
    %68 = vmatprep.subr.bf16.mxu0 0
    %69 = vmatpush1.bf16.msra.mxu0 0
    %70 = vmatprep.subr.bf16.mxu0 0
    %71 = vmatpush1.bf16.msra.mxu0 0
    %72 = vmatprep.subr.bf16.mxu0 0
    %73 = vmatpush1.bf16.msra.mxu0 0
    %74 = vmatprep.subr.bf16.mxu0 0
    %75 = vmatpush1.bf16.msra.mxu0 0
    %76 = vmatprep.subr.bf16.mxu0 0
    %77 = vmatpush1.bf16.msra.mxu0 0
    %78 = vmatprep.subr.bf16.mxu0 0
    %79 = vmatpush1.bf16.msra.mxu0 0
    %80 = vmatprep.subr.bf16.mxu0 0
    %81 = vmatpush1.bf16.msra.mxu0 0
    %82 = vmatprep.subr.bf16.mxu0 0
    %83 = vmatpush1.bf16.msra.mxu0 0
    %84 = vmatprep.mubr.bf16.mxu0 0
    %85 = vmatmul.mubr.bf16.gmra.mrb[0].mxu0 %v40
    %v86 = vpop.f32.mrb[0].mxu0
    %v87 = vadd.f32 %v26, %v86
    %v88 = vpop.f32.mrb[0].mxu0
    %v89 = vpop.f32.mrb[0].mxu0
    %v90 = vadd.f32 %v26, %v89
    %v91 = vpop.f32.mrb[0].mxu0
    %92 = vmatprep.mubr.bf16.mxu0 0
    %93 = vmatmul.mubr.bf16.gmra.mrb[0].mxu0 %v43
    %v94 = vpop.f32.mrb[0].mxu0
    %v95 = vadd.f32 %v26, %v94
    %v96 = vpop.f32.mrb[0].mxu0
    %v97 = vpop.f32.mrb[0].mxu0
    %v98 = vadd.f32 %v26, %v97
    %v99 = vpop.f32.mrb[0].mxu0
    %100 = vdwg.mxu0
    %v101 = vmax.f32 %v87, 0.0
    %v102 = vmax.f32 %v90, 0.0
    %v103 = vmax.f32 %v95, 0.0
    %v104 = vmax.f32 %v98, 0.0
    %v105 = vpack.c.bf16 %v102, %v101
    %v106 = vpack.c.bf16 %v104, %v103
    %v109 = vunpack.c.l.b16 %v105
    %v110 = vunpack.c.h.b16 %v105
    %v111 = vunpack.c.l.b16 %v106
    %v112 = vunpack.c.h.b16 %v106
    %v113 = vpack.c.b16 %v109, %v109
    %v114 = vpack.c.b16 %v110, %v110
    %v115 = vpack.c.b16 %v111, %v111
    %v116 = vpack.c.b16 %v112, %v112
    %121 = vst [vmem:[#allocation2] sm:$0xf] %v113
    %122 = vst [vmem:[#allocation2 + $0x4] sm:$0xf] %v114
    %123 = vst [vmem:[#allocation2 + $0x8] sm:$0xf] %v115
    %124 = vst [vmem:[#allocation2 + $0xc] sm:$0xf] %v116
    // Predicated region
    $region14: #{tpu_custom_call.1} parent=1 // pred_check
      _
    $region15: #{tpu_custom_call.1} parent=1 // pred_check_branch
      %126 = sbr.rel (0) target = $region17
    $region16: #{tpu_custom_call.1} parent=1 // pred_region
      %s128 = ssub.s32 256, 256
      %129 = vsyncadd [#allocation3], %s128
      %s130 = sshll.u32 [#allocation2], 4
      %s131 = int_to_ptr.vmem [resolvable:$true] %s130
      %136 = dma.vmem_to_hbm [thread:$0]  %s131, 256, %s3, [#allocation3], 64, 64, 4
    $region17: #{tpu_custom_call.1} parent=1 // pred_fallthru
      _
    // Predicated region
    $region18: #{tpu_custom_call.1} parent=1 // pred_check
      _
    $region19: #{tpu_custom_call.1} parent=1 // pred_check_branch
      %138 = sbr.rel (0) target = $region21
    $region20: #{tpu_custom_call.1} parent=1 // pred_region
      %139 = dma.done [#allocation3], 256
    $region21: #{tpu_custom_call.1} parent=1 // pred_fallthru
      _
    %140 = vsyncpa [#allocation3], 1

</llo_original>
